<compile_context>
chip_gen: v6e
topology: v6e:2x2x1
jax: 0.10.0
libtpu: 0.0.40
codegen_flags: <defaults>
</compile_context>

<pallas_src>
import numpy as np
import jax
import jax.numpy as jnp
from jax.experimental import pallas as pl
from jax.experimental.pallas import tpu as pltpu


def _round_up(x, m):
    return ((x + m - 1) // m) * m


def _bert_embeddings_kernel(wid_ref, aid_ref, pid_ref,   # (tile_n, 1) int32 row indices
                            tab_ref,                       # (T_pad, H) concat table (VMEM)
                            gamma_ref, beta_ref,           # (1, H) LayerNorm affine
                            out_ref):                      # (tile_n, H) output tile
    tile_n, _ = out_ref.shape
    t_pad = tab_ref.shape[0]

    # Multi-hot selection matrix: one row per token, ones at the (disjoint)
    # word / age / posi row offsets of the concatenated table.
    lane = jax.lax.broadcasted_iota(jnp.int32, (tile_n, t_pad), 1)
    hot = ((lane == wid_ref[...]) |
           (lane == aid_ref[...]) |
           (lane == pid_ref[...])).astype(jnp.float32)

    # Fused gather + 3-way sum on the MXU:  x[t, :] = w_row + a_row + p_row
    x = jnp.dot(hot, tab_ref[...], preferred_element_type=jnp.float32)

    # LayerNorm, eps = 1e-12 (two-pass variance: cannot go negative -> no NaN).
    mean = jnp.mean(x, axis=-1, keepdims=True)
    xc = x - mean
    var = jnp.mean(xc * xc, axis=-1, keepdims=True)
    y = xc * jax.lax.rsqrt(var + jnp.float32(1e-12))

    # Dropout omitted (identity in eval mode).
    out_ref[...] = (y * gamma_ref[...] + beta_ref[...]).astype(out_ref.dtype)


def bert_embeddings(word_ids, age_ids, posi_ids,
                    word_tab, age_tab, posi_tab, gamma, beta,
                    *, tile_n=256, out_dtype=jnp.float32):
    B, S = word_ids.shape
    V, H = word_tab.shape
    A = age_tab.shape[0]
    P = posi_tab.shape[0]
    N = B * S

    # Big tiles for real workloads; clamp so tiny demos don't over-pad.
    tile_n = max(8, min(_round_up(tile_n, 8), _round_up(N, 8)))
    num_tiles = pl.cdiv(N, tile_n)
    n_pad = num_tiles * tile_n

    # Concatenated embedding table: [word ; age ; posi], zero-padded to a lane-dense
    # row count.  Stays fully VMEM-resident (BEHRT tables are small).
    T = V + A + P
    t_pad = _round_up(T, 128)
    tab = jnp.zeros((t_pad, H), jnp.float32)
    tab = tab.at[:V].set(word_tab.astype(jnp.float32))
    tab = tab.at[V:V + A].set(age_tab.astype(jnp.float32))
    tab = tab.at[V + A:V + A + P].set(posi_tab.astype(jnp.float32))

    def prep_ids(ids, vocab, offset):
        flat = ids.reshape(N).astype(jnp.int32)
        # valid ids get their offset into the concat table; invalid / padded ids
        # become -1 (match no row -> zero contribution).
        flat = jnp.where((flat >= 0) & (flat < vocab), flat + offset, -1)
        flat = jnp.pad(flat, (0, n_pad - N), constant_values=-1)
        return flat.reshape(n_pad, 1)

    wid = prep_ids(word_ids, V, 0)
    aid = prep_ids(age_ids, A, V)
    pid = prep_ids(posi_ids, P, V + A)

    grid_spec = pltpu.PrefetchScalarGridSpec(
        num_scalar_prefetch=0,
        grid=(num_tiles,),
        in_specs=[
            pl.BlockSpec((tile_n, 1), lambda i: (i, 0)),    # word ids
            pl.BlockSpec((tile_n, 1), lambda i: (i, 0)),    # age ids
            pl.BlockSpec((tile_n, 1), lambda i: (i, 0)),    # posi ids
            pl.BlockSpec((t_pad, H), lambda i: (0, 0)),     # concat table, VMEM resident
            pl.BlockSpec((1, H), lambda i: (0, 0)),         # gamma
            pl.BlockSpec((1, H), lambda i: (0, 0)),         # beta
        ],
        out_specs=pl.BlockSpec((tile_n, H), lambda i: (i, 0)),
    )

    out = pl.pallas_call(
        _bert_embeddings_kernel,
        out_shape=jax.ShapeDtypeStruct((n_pad, H), out_dtype),
        grid_spec=grid_spec,
        compiler_params=pltpu.CompilerParams(
            dimension_semantics=("parallel",),
            # NOTE: for real (multi-MiB) tables raise vmem_limit_bytes here.
        ),
    )(wid, aid, pid, tab,
      gamma.reshape(1, H).astype(jnp.float32),
      beta.reshape(1, H).astype(jnp.float32))

    return out[:N].reshape(B, S, H)


def init_posi_embedding(max_position_embedding, hidden_size):
    """Sinusoidal table exactly as BertEmbeddings._init_posi_embedding."""
    lookup = np.zeros((max_position_embedding, hidden_size), dtype=np.float32)
    for pos in range(max_position_embedding):
        for idx in np.arange(0, hidden_size, step=2):
            lookup[pos, idx] = np.sin(pos / 10000 ** (2 * idx / hidden_size))
    for pos in range(max_position_embedding):
        for idx in np.arange(1, hidden_size, step=2):
            lookup[pos, idx] = np.cos(pos / 10000 ** (2 * idx / hidden_size))
    return jnp.asarray(lookup)


def reference(word_ids, age_ids, posi_ids, word_tab, age_tab, posi_tab, gamma, beta):
    x = word_tab[word_ids] + age_tab[age_ids] + posi_tab[posi_ids]
    mean = jnp.mean(x, axis=-1, keepdims=True)
    var = jnp.mean(jnp.square(x - mean), axis=-1, keepdims=True)
    y = (x - mean) / jnp.sqrt(var + 1e-12)
    return y * gamma + beta


if __name__ == "__main__":
    # small config (H chosen 128-aligned so output tiles are lane-dense)
    B, S, H = 2, 13, 128
    vocab_size = 30
    age_vocab_size = 10
    max_position_embeddings = 16

    key = jax.random.PRNGKey(0)
    k_w, k_a, k_wid, k_aid = jax.random.split(key, 4)

    word_tab = 0.02 * jax.random.normal(k_w, (vocab_size, H), dtype=jnp.float32)
    age_tab = 0.02 * jax.random.normal(k_a, (age_vocab_size, H), dtype=jnp.float32)
    posi_tab = init_posi_embedding(max_position_embeddings, H)
    gamma = jnp.ones((H,), dtype=jnp.float32)   # BertLayerNorm weight
    beta = jnp.zeros((H,), dtype=jnp.float32)   # BertLayerNorm bias

    word_ids = jax.random.randint(k_wid, (B, S), 0, vocab_size, dtype=jnp.int32)
    age_ids = jax.random.randint(k_aid, (B, S), 0, age_vocab_size, dtype=jnp.int32)
    posi_ids = jnp.tile(jnp.arange(S, dtype=jnp.int32)[None, :], (B, 1))

    out = bert_embeddings(word_ids, age_ids, posi_ids,
                          word_tab, age_tab, posi_tab, gamma, beta)
    out = jax.block_until_ready(out)

    ref = reference(word_ids, age_ids, posi_ids,
                    word_tab, age_tab, posi_tab, gamma, beta)
    assert out.shape == (B, S, H)
    np.testing.assert_allclose(np.asarray(out), np.asarray(ref), atol=1e-3, rtol=1e-3)

    print("KERNEL_OK")
</pallas_src>

<mosaic_0001>
module attributes {stable_mosaic.version = 11 : i64} {
  func.func @_bert_embeddings_kernel(%arg0: i32, %arg1: memref<32x1xi32, #tpu.memory_space<vmem>>, %arg2: memref<32x1xi32, #tpu.memory_space<vmem>>, %arg3: memref<32x1xi32, #tpu.memory_space<vmem>>, %arg4: memref<128x128xf32, #tpu.memory_space<vmem>>, %arg5: memref<1x128xf32, #tpu.memory_space<vmem>>, %arg6: memref<1x128xf32, #tpu.memory_space<vmem>>, %arg7: memref<32x128xf32, #tpu.memory_space<vmem>>) attributes {dimension_semantics = [#tpu.dimension_semantics<parallel>], iteration_bounds = array<i64: 1>, scalar_prefetch = 0 : i64, scratch_operands = 0 : i64, tpu.core_type = #tpu.core_type<tc>, window_params = [{transform_indices = @transform_0, window_bounds = array<i64: 32, 1>}, {transform_indices = @transform_1, window_bounds = array<i64: 32, 1>}, {transform_indices = @transform_2, window_bounds = array<i64: 32, 1>}, {pipeline_mode = #tpu.pipeline_mode<synchronous>, transform_indices = @transform_3, window_bounds = array<i64: 128, 128>}, {pipeline_mode = #tpu.pipeline_mode<synchronous>, transform_indices = @transform_4, window_bounds = array<i64: 1, 128>}, {pipeline_mode = #tpu.pipeline_mode<synchronous>, transform_indices = @transform_5, window_bounds = array<i64: 1, 128>}, {transform_indices = @transform_6, window_bounds = array<i64: 32, 128>}]} {
    %0 = tpu.iota {dimensions = array<i32: 1>} : vector<32x128xi32>
    %c0 = arith.constant 0 : index
    %c0_0 = arith.constant 0 : index
    %1 = vector.load %arg1[%c0, %c0_0] : memref<32x1xi32, #tpu.memory_space<vmem>>, vector<32x1xi32>
    %2 = vector.broadcast %1 : vector<32x1xi32> to vector<32x128xi32>
    %3 = arith.cmpi eq, %0, %2 : vector<32x128xi32>
    %c0_1 = arith.constant 0 : index
    %c0_2 = arith.constant 0 : index
    %4 = vector.load %arg2[%c0_1, %c0_2] : memref<32x1xi32, #tpu.memory_space<vmem>>, vector<32x1xi32>
    %5 = vector.broadcast %4 : vector<32x1xi32> to vector<32x128xi32>
    %6 = arith.cmpi eq, %0, %5 : vector<32x128xi32>
    %7 = arith.ori %3, %6 : vector<32x128xi1>
    %c0_3 = arith.constant 0 : index
    %c0_4 = arith.constant 0 : index
    %8 = vector.load %arg3[%c0_3, %c0_4] : memref<32x1xi32, #tpu.memory_space<vmem>>, vector<32x1xi32>
    %9 = vector.broadcast %8 : vector<32x1xi32> to vector<32x128xi32>
    %10 = arith.cmpi eq, %0, %9 : vector<32x128xi32>
    %11 = arith.ori %7, %10 : vector<32x128xi1>
    %12 = arith.extui %11 : vector<32x128xi1> to vector<32x128xi32>
    %13 = arith.sitofp %12 : vector<32x128xi32> to vector<32x128xf32>
    %c0_5 = arith.constant 0 : index
    %c0_6 = arith.constant 0 : index
    %14 = vector.load %arg4[%c0_5, %c0_6] : memref<128x128xf32, #tpu.memory_space<vmem>>, vector<128x128xf32>
    %cst = arith.constant dense<0.000000e+00> : vector<32x128xf32>
    %15 = tpu.matmul %13, %14, %cst {dimension_numbers = #tpu.dot_dimension_numbers<[1], [0], [0], [1], [0, 0, 1, 1], [], []>} : vector<32x128xf32>, vector<128x128xf32>, vector<32x128xf32> -> vector<32x128xf32>
    %cst_7 = arith.constant dense<0.000000e+00> : vector<32xf32>
    %16 = vector.multi_reduction <add>, %15, %cst_7 [1] : vector<32x128xf32> to vector<32xf32>
    %17 = vector.shape_cast %16 : vector<32xf32> to vector<32x1xf32>
    %cst_8 = arith.constant 1.280000e+02 : f32
    %18 = vector.broadcast %cst_8 : f32 to vector<32x1xf32>
    %19 = arith.divf %17, %18 : vector<32x1xf32>
    %20 = vector.broadcast %19 : vector<32x1xf32> to vector<32x128xf32>
    %21 = arith.subf %15, %20 : vector<32x128xf32>
    %22 = arith.mulf %21, %21 : vector<32x128xf32>
    %cst_9 = arith.constant dense<0.000000e+00> : vector<32xf32>
    %23 = vector.multi_reduction <add>, %22, %cst_9 [1] : vector<32x128xf32> to vector<32xf32>
    %24 = vector.shape_cast %23 : vector<32xf32> to vector<32x1xf32>
    %cst_10 = arith.constant 1.280000e+02 : f32
    %25 = vector.broadcast %cst_10 : f32 to vector<32x1xf32>
    %26 = arith.divf %24, %25 : vector<32x1xf32>
    %cst_11 = arith.constant 9.99999996E-13 : f32
    %27 = vector.broadcast %cst_11 : f32 to vector<32x1xf32>
    %28 = arith.addf %26, %27 : vector<32x1xf32>
    %29 = math.rsqrt %28 : vector<32x1xf32>
    %30 = vector.broadcast %29 : vector<32x1xf32> to vector<32x128xf32>
    %31 = arith.mulf %21, %30 : vector<32x128xf32>
    %c0_12 = arith.constant 0 : index
    %c0_13 = arith.constant 0 : index
    %32 = vector.load %arg5[%c0_12, %c0_13] : memref<1x128xf32, #tpu.memory_space<vmem>>, vector<1x128xf32>
    %33 = vector.broadcast %32 : vector<1x128xf32> to vector<32x128xf32>
    %34 = arith.mulf %31, %33 : vector<32x128xf32>
    %c0_14 = arith.constant 0 : index
    %c0_15 = arith.constant 0 : index
    %35 = vector.load %arg6[%c0_14, %c0_15] : memref<1x128xf32, #tpu.memory_space<vmem>>, vector<1x128xf32>
    %36 = vector.broadcast %35 : vector<1x128xf32> to vector<32x128xf32>
    %37 = arith.addf %34, %36 : vector<32x128xf32>
    %c0_16 = arith.constant 0 : index
    %c0_17 = arith.constant 0 : index
    %38 = vector.load %arg7[%c0_16, %c0_17] : memref<32x128xf32, #tpu.memory_space<vmem>>, vector<32x128xf32>
    tpu.vector_store %arg7[%c0_16, %c0_17], %37 {strides = array<i32>} : memref<32x128xf32, #tpu.memory_space<vmem>>, vector<32x128xf32>,
    return
  }
  func.func @transform_0(%arg0: i32) -> (i32, i32) {
    %c0_i32 = arith.constant 0 : i32
    %c0_i32_0 = arith.constant 0 : i32
    return %arg0, %c0_i32 : i32, i32
  }
  func.func @transform_1(%arg0: i32) -> (i32, i32) {
    %c0_i32 = arith.constant 0 : i32
    %c0_i32_0 = arith.constant 0 : i32
    return %arg0, %c0_i32 : i32, i32
  }
  func.func @transform_2(%arg0: i32) -> (i32, i32) {
    %c0_i32 = arith.constant 0 : i32
    %c0_i32_0 = arith.constant 0 : i32
    return %arg0, %c0_i32 : i32, i32
  }
  func.func @transform_3(%arg0: i32) -> (i32, i32) {
    %c0_i32 = arith.constant 0 : i32
    %c0_i32_0 = arith.constant 0 : i32
    %c0_i32_1 = arith.constant 0 : i32
    return %c0_i32, %c0_i32_0 : i32, i32
  }
  func.func @transform_4(%arg0: i32) -> (i32, i32) {
    %c0_i32 = arith.constant 0 : i32
    %c0_i32_0 = arith.constant 0 : i32
    %c0_i32_1 = arith.constant 0 : i32
    return %c0_i32, %c0_i32_0 : i32, i32
  }
  func.func @transform_5(%arg0: i32) -> (i32, i32) {
    %c0_i32 = arith.constant 0 : i32
    %c0_i32_0 = arith.constant 0 : i32
    %c0_i32_1 = arith.constant 0 : i32
    return %c0_i32, %c0_i32_0 : i32, i32
  }
  func.func @transform_6(%arg0: i32) -> (i32, i32) {
    %c0_i32 = arith.constant 0 : i32
    %c0_i32_0 = arith.constant 0 : i32
    return %arg0, %c0_i32 : i32, i32
  }
}

</mosaic_0001>

<llo_original>
// kernel: tpu_custom_call.1
$region0: #{tpu_custom_call.1}
  #allocation0 [shape = 'u32[]', space=smem, size = 0x4, offset = 0x4, fixed_abs, tag = 'smem constant byte address 0x4 - core index']
  #allocation1 [shape = 'u32[144,128]{1,0:T(1,128)}', space=vmem, size = 0x12000, scoped, tag = 'internal scratch']
  %s0 = inlined_call_operand.vmem [shape: s32[32,1], index: 0, kind: input, shape index: {}]
  %s1 = inlined_call_operand.vmem [shape: s32[32,1], index: 1, kind: input, shape index: {}]
  %s2 = inlined_call_operand.vmem [shape: s32[32,1], index: 2, kind: input, shape index: {}]
  %s3 = inlined_call_operand.hbm [shape: f32[128,128], index: 3, kind: input, shape index: {}]
  %s4 = inlined_call_operand.vmem [shape: f32[1,128], index: 4, kind: input, shape index: {}]
  %s5 = inlined_call_operand.vmem [shape: f32[1,128], index: 5, kind: input, shape index: {}]
  %s6 = inlined_call_operand.hbm [shape: f32[32,128], index: 6, kind: output, shape index: {}]
  %s7 = sld [smem:[#allocation0]]
  $region38: #{tpu_custom_call.1} parent=0
    _
  %s9 = ssub.s32 1, %s7
  %s10 = scalar_select 0, %s9, %s7
  $region1: #{tpu_custom_call.1} parent=0
    #allocation2 [shape = 'u8[65536]{0}', space=vmem, size = 0x10000, scoped, tag = 'input window, operand 3, single buffered']
    #allocation3 [shape = 's32[1]{0}', space=sflag, size = 0x4, scoped, tag = 'scoped memory for tpu_custom_call.1']
    #allocation4 [shape = 's32[1]{0}', space=sflag, size = 0x4, scoped, tag = 'scoped memory for tpu_custom_call.1']
    #allocation5 [shape = 'u8[16384]{0}', space=vmem, size = 0x4000, scoped, tag = 'output window, operand 0, single buffered']
    %11 = vsyncpa [#allocation3], 0
    %12 = vsyncpa [#allocation4], 0
    // Predicated region
    $region2: #{tpu_custom_call.1} parent=1 // pred_check
      _
    $region3: #{tpu_custom_call.1} parent=1 // pred_check_branch
      %14 = sbr.rel (0) target = $region5
    $region4: #{tpu_custom_call.1} parent=1 // pred_region
      _
    $region5: #{tpu_custom_call.1} parent=1 // pred_fallthru
      _
    // Predicated region
    $region6: #{tpu_custom_call.1} parent=1 // pred_check
      _
    $region7: #{tpu_custom_call.1} parent=1 // pred_check_branch
      %16 = sbr.rel (0) target = $region9
    $region8: #{tpu_custom_call.1} parent=1 // pred_region
      _
    $region9: #{tpu_custom_call.1} parent=1 // pred_fallthru
      _
    // Predicated region
    $region10: #{tpu_custom_call.1} parent=1 // pred_check
      _
    $region11: #{tpu_custom_call.1} parent=1 // pred_check_branch
      %18 = sbr.rel (0) target = $region13
    $region12: #{tpu_custom_call.1} parent=1 // pred_region
      _
    $region13: #{tpu_custom_call.1} parent=1 // pred_fallthru
      _
    // Predicated region
    $region14: #{tpu_custom_call.1} parent=1 // pred_check
      _
    $region15: #{tpu_custom_call.1} parent=1 // pred_check_branch
      %20 = sbr.rel (0) target = $region17
    $region16: #{tpu_custom_call.1} parent=1 // pred_region
      %s22 = ssub.s32 2048, 2048
      %23 = vsyncadd [#allocation3], %s22
      %s24 = sshll.u32 [#allocation2], 4
      %s25 = int_to_ptr.vmem [resolvable:$true] %s24
      %30 = dma.hbm_to_vmem [thread:$0]  %s3, 2048, %s25, [#allocation3], 128, 128, 8
    $region17: #{tpu_custom_call.1} parent=1 // pred_fallthru
      _
    // Predicated region
    $region18: #{tpu_custom_call.1} parent=1 // pred_check
      _
    $region19: #{tpu_custom_call.1} parent=1 // pred_check_branch
      %32 = sbr.rel (0) target = $region21
    $region20: #{tpu_custom_call.1} parent=1 // pred_region
      _
    $region21: #{tpu_custom_call.1} parent=1 // pred_fallthru
      _
    // Predicated region
    $region22: #{tpu_custom_call.1} parent=1 // pred_check
      _
    $region23: #{tpu_custom_call.1} parent=1 // pred_check_branch
      %34 = sbr.rel (0) target = $region25
    $region24: #{tpu_custom_call.1} parent=1 // pred_region
      _
    $region25: #{tpu_custom_call.1} parent=1 // pred_fallthru
      _
    // Predicated region
    $region26: #{tpu_custom_call.1} parent=1 // pred_check
      _
    $region27: #{tpu_custom_call.1} parent=1 // pred_check_branch
      %36 = sbr.rel (0) target = $region29
    $region28: #{tpu_custom_call.1} parent=1 // pred_region
      %37 = dma.done [#allocation3], 2048
    $region29: #{tpu_custom_call.1} parent=1 // pred_fallthru
      _
    %v38 = vlaneseq
    %v39 = vand.u32 %v38, 127
    %v40 = vld [vmem:[%s0] sm:$0xff]
    %v41 = vld [vmem:[%s0 + $0x8] sm:$0xff]
    %v42 = vld [vmem:[%s0 + $0x10] sm:$0xff]
    %v43 = vld [vmem:[%s0 + $0x18] sm:$0xff]
    %44 = vset.pattern.permute.xlu0 0
    %45 = vperm.xlu0 %44, %v40
    %v46 = vpop.permute.xlu0 %45
    %47 = vset.pattern.permute.xlu0 0
    %48 = vperm.xlu0 %47, %v41
    %v49 = vpop.permute.xlu0 %48
    %50 = vset.pattern.permute.xlu0 0
    %51 = vperm.xlu0 %50, %v42
    %v52 = vpop.permute.xlu0 %51
    %53 = vset.pattern.permute.xlu0 0
    %54 = vperm.xlu0 %53, %v43
    %v55 = vpop.permute.xlu0 %54
    %vm56 = vcmp.eq.s32.totalorder %v39, %v46
    %vm57 = vcmp.eq.s32.totalorder %v39, %v49
    %vm58 = vcmp.eq.s32.totalorder %v39, %v52
    %vm59 = vcmp.eq.s32.totalorder %v39, %v55
    %v60 = vld [vmem:[%s1] sm:$0xff]
    %v61 = vld [vmem:[%s1 + $0x8] sm:$0xff]
    %v62 = vld [vmem:[%s1 + $0x10] sm:$0xff]
    %v63 = vld [vmem:[%s1 + $0x18] sm:$0xff]
    %64 = vset.pattern.permute.xlu0 0
    %65 = vperm.xlu0 %64, %v60
    %v66 = vpop.permute.xlu0 %65
    %67 = vset.pattern.permute.xlu0 0
    %68 = vperm.xlu0 %67, %v61
    %v69 = vpop.permute.xlu0 %68
    %70 = vset.pattern.permute.xlu0 0
    %71 = vperm.xlu0 %70, %v62
    %v72 = vpop.permute.xlu0 %71
    %73 = vset.pattern.permute.xlu0 0
    %74 = vperm.xlu0 %73, %v63
    %v75 = vpop.permute.xlu0 %74
    %vm76 = vcmp.eq.s32.totalorder %v39, %v66
    %vm77 = vcmp.eq.s32.totalorder %v39, %v69
    %vm78 = vcmp.eq.s32.totalorder %v39, %v72
    %vm79 = vcmp.eq.s32.totalorder %v39, %v75
    %vm80 = vmor %vm56, %vm76
    %vm81 = vmor %vm57, %vm77
    %vm82 = vmor %vm58, %vm78
    %vm83 = vmor %vm59, %vm79
    %v84 = vld [vmem:[%s2] sm:$0xff]
    %v85 = vld [vmem:[%s2 + $0x8] sm:$0xff]
    %v86 = vld [vmem:[%s2 + $0x10] sm:$0xff]
    %v87 = vld [vmem:[%s2 + $0x18] sm:$0xff]
    %88 = vset.pattern.permute.xlu0 0
    %89 = vperm.xlu0 %88, %v84
    %v90 = vpop.permute.xlu0 %89
    %91 = vset.pattern.permute.xlu0 0
    %92 = vperm.xlu0 %91, %v85
    %v93 = vpop.permute.xlu0 %92
    %94 = vset.pattern.permute.xlu0 0
    %95 = vperm.xlu0 %94, %v86
    %v96 = vpop.permute.xlu0 %95
    %97 = vset.pattern.permute.xlu0 0
    %98 = vperm.xlu0 %97, %v87
    %v99 = vpop.permute.xlu0 %98
    %vm100 = vcmp.eq.s32.totalorder %v39, %v90
    %vm101 = vcmp.eq.s32.totalorder %v39, %v93
    %vm102 = vcmp.eq.s32.totalorder %v39, %v96
    %vm103 = vcmp.eq.s32.totalorder %v39, %v99
    %vm104 = vmor %vm80, %vm100
    %vm105 = vmor %vm81, %vm101
    %vm106 = vmor %vm82, %vm102
    %vm107 = vmor %vm83, %vm103
    %v108 = vsel %vm104, 1, 0
    %v109 = vsel %vm105, 1, 0
    %v110 = vsel %vm106, 1, 0
    %v111 = vsel %vm107, 1, 0
    %v112 = vcvt.s32.f32 %v108
    %v113 = vcvt.s32.f32 %v109
    %v114 = vcvt.s32.f32 %v110
    %v115 = vcvt.s32.f32 %v111
    %v116 = vld [vmem:[#allocation2] sm:$0xff]
    %v117 = vld [vmem:[#allocation2 + $0x8] sm:$0xff]
    %v118 = vld [vmem:[#allocation2 + $0x10] sm:$0xff]
    %v119 = vld [vmem:[#allocation2 + $0x18] sm:$0xff]
    %v120 = vld [vmem:[#allocation2 + $0x20] sm:$0xff]
    %v121 = vld [vmem:[#allocation2 + $0x28] sm:$0xff]
    %v122 = vld [vmem:[#allocation2 + $0x30] sm:$0xff]
    %v123 = vld [vmem:[#allocation2 + $0x38] sm:$0xff]
    %v124 = vld [vmem:[#allocation2 + $0x40] sm:$0xff]
    %v125 = vld [vmem:[#allocation2 + $0x48] sm:$0xff]
    %v126 = vld [vmem:[#allocation2 + $0x50] sm:$0xff]
    %v127 = vld [vmem:[#allocation2 + $0x58] sm:$0xff]
    %v128 = vld [vmem:[#allocation2 + $0x60] sm:$0xff]
    %v129 = vld [vmem:[#allocation2 + $0x68] sm:$0xff]
    %v130 = vld [vmem:[#allocation2 + $0x70] sm:$0xff]
    %v131 = vld [vmem:[#allocation2 + $0x78] sm:$0xff]
    %132 = vmatprep.subr.mxu0 0.0
    %133 = vmatpush1.msra.mxu0 %v131
    %134 = vmatprep.subr.mxu0 0.0
    %135 = vmatpush1.msra.mxu0 %v130
    %136 = vmatprep.subr.mxu0 0.0
    %137 = vmatpush1.msra.mxu0 %v129
    %138 = vmatprep.subr.mxu0 0.0
    %139 = vmatpush1.msra.mxu0 %v128
    %140 = vmatprep.subr.mxu0 0.0
    %141 = vmatpush1.msra.mxu0 %v127
    %142 = vmatprep.subr.mxu0 0.0
    %143 = vmatpush1.msra.mxu0 %v126
    %144 = vmatprep.subr.mxu0 0.0
    %145 = vmatpush1.msra.mxu0 %v125
    %146 = vmatprep.subr.mxu0 0.0
    %147 = vmatpush1.msra.mxu0 %v124
    %148 = vmatprep.subr.mxu0 0.0
    %149 = vmatpush1.msra.mxu0 %v123
    %150 = vmatprep.subr.mxu0 0.0
    %151 = vmatpush1.msra.mxu0 %v122
    %152 = vmatprep.subr.mxu0 0.0
    %153 = vmatpush1.msra.mxu0 %v121
    %154 = vmatprep.subr.mxu0 0.0
    %155 = vmatpush1.msra.mxu0 %v120
    %156 = vmatprep.subr.mxu0 0.0
    %157 = vmatpush1.msra.mxu0 %v119
    %158 = vmatprep.subr.mxu0 0.0
    %159 = vmatpush1.msra.mxu0 %v118
    %160 = vmatprep.subr.mxu0 0.0
    %161 = vmatpush1.msra.mxu0 %v117
    %162 = vmatprep.subr.mxu0 0.0
    %163 = vmatpush1.msra.mxu0 %v116
    %164 = vmatprep.subr.mxu0 0.0
    %165 = vmatpush2.msra.mxu0 0.0
    %166 = vmatprep.subr.mxu0 0.0
    %167 = vmatpush2.msra.mxu0 0.0
    %168 = vmatprep.subr.mxu0 0.0
    %169 = vmatpush2.msra.mxu0 0.0
    %170 = vmatprep.subr.mxu0 0.0
    %171 = vmatpush2.msra.mxu0 0.0
    %172 = vmatprep.subr.mxu0 0.0
    %173 = vmatpush2.msra.mxu0 0.0
    %174 = vmatprep.subr.mxu0 0.0
    %175 = vmatpush2.msra.mxu0 0.0
    %176 = vmatprep.subr.mxu0 0.0
    %177 = vmatpush2.msra.mxu0 0.0
    %178 = vmatprep.subr.mxu0 0.0
    %179 = vmatpush2.msra.mxu0 0.0
    %180 = vmatprep.subr.mxu0 0.0
    %181 = vmatpush2.msra.mxu0 0.0
    %182 = vmatprep.subr.mxu0 0.0
    %183 = vmatpush2.msra.mxu0 0.0
    %184 = vmatprep.subr.mxu0 0.0
    %185 = vmatpush2.msra.mxu0 0.0
    %186 = vmatprep.subr.mxu0 0.0
    %187 = vmatpush2.msra.mxu0 0.0
    %188 = vmatprep.subr.mxu0 0.0
    %189 = vmatpush2.msra.mxu0 0.0
    %190 = vmatprep.subr.mxu0 0.0
    %191 = vmatpush2.msra.mxu0 0.0
    %192 = vmatprep.subr.mxu0 0.0
    %193 = vmatpush2.msra.mxu0 0.0
    %194 = vmatprep.subr.mxu0 0.0
    %195 = vmatpush2.msra.mxu0 0.0
    %196 = vmatprep.mubr.f32.mxu0 0.0
    %197 = vmatmul.mubr.f32.gmra.mxu0 %v112
    %v198 = vpop.f32.mrf.mxu0
    %v199 = vadd.f32 0.0, %v198
    %v200 = vpop.f32.mrf.mxu0
    %201 = vmatprep.mubr.f32.mxu0 0.0
    %202 = vmatmul.mubr.f32.gmra.mxu0 %v113
    %v203 = vpop.f32.mrf.mxu0
    %v204 = vadd.f32 0.0, %v203
    %v205 = vpop.f32.mrf.mxu0
    %206 = vmatprep.mubr.f32.mxu0 0.0
    %207 = vmatmul.mubr.f32.gmra.mxu0 %v114
    %v208 = vpop.f32.mrf.mxu0
    %v209 = vadd.f32 0.0, %v208
    %v210 = vpop.f32.mrf.mxu0
    %211 = vmatprep.mubr.f32.mxu0 0.0
    %212 = vmatmul.mubr.f32.gmra.mxu0 %v115
    %v213 = vpop.f32.mrf.mxu0
    %v214 = vadd.f32 0.0, %v213
    %v215 = vpop.f32.mrf.mxu0
    %216 = vdwg.mxu0
    %217 = vadd.xlane.f32.xlu0 %v199
    %v218 = vpop.xlane.xlu0 %217
    %219 = vadd.xlane.f32.xlu0 %v204
    %v220 = vpop.xlane.xlu0 %219
    %221 = vadd.xlane.f32.xlu0 %v209
    %v222 = vpop.xlane.xlu0 %221
    %223 = vadd.xlane.f32.xlu0 %v214
    %v224 = vpop.xlane.xlu0 %223
    %v225 = vrcp.pop 128.0
    %v226 = vmul.f32 %v218, %v225
    %v227 = vmul.f32 %v220, %v225
    %v228 = vmul.f32 %v222, %v225
    %v229 = vmul.f32 %v224, %v225
    %v230 = vsub.f32 %v199, %v226
    %v231 = vsub.f32 %v204, %v227
    %v232 = vsub.f32 %v209, %v228
    %v233 = vsub.f32 %v214, %v229
    %v234 = vmul.f32 %v230, %v230
    %v235 = vmul.f32 %v231, %v231
    %v236 = vmul.f32 %v232, %v232
    %v237 = vmul.f32 %v233, %v233
    %238 = vadd.xlane.f32.xlu0 %v234
    %v239 = vpop.xlane.xlu0 %238
    %240 = vadd.xlane.f32.xlu0 %v235
    %v241 = vpop.xlane.xlu0 %240
    %242 = vadd.xlane.f32.xlu0 %v236
    %v243 = vpop.xlane.xlu0 %242
    %244 = vadd.xlane.f32.xlu0 %v237
    %v245 = vpop.xlane.xlu0 %244
    %v246 = vmul.f32 %v239, %v225
    %v247 = vmul.f32 %v241, %v225
    %v248 = vmul.f32 %v243, %v225
    %v249 = vmul.f32 %v245, %v225
    %v250 = vadd.f32 %v246, 1e-12
    %v251 = vadd.f32 %v247, 1e-12
    %v252 = vadd.f32 %v248, 1e-12
    %v253 = vadd.f32 %v249, 1e-12
    %v254 = vrsqrt.pop %v250
    %v255 = vrsqrt.pop %v251
    %v256 = vrsqrt.pop %v252
    %v257 = vrsqrt.pop %v253
    %v258 = vmul.f32 %v230, %v254
    %v259 = vmul.f32 %v231, %v255
    %v260 = vmul.f32 %v232, %v256
    %v261 = vmul.f32 %v233, %v257
    %v262 = vld [vmem:[%s4] sm:$0x1]
    %v264 = vlaneseq
    %v265 = vshrl.u32 %v264, 7
    %v266 = vsub.s32 0, %v265
    %v267 = vrot.slane %v262, %v266
    %v269 = vmul.f32 %v258, %v267
    %v270 = vmul.f32 %v259, %v267
    %v271 = vmul.f32 %v260, %v267
    %v272 = vmul.f32 %v261, %v267
    %v273 = vld [vmem:[%s5] sm:$0x1]
    %v275 = vlaneseq
    %v276 = vshrl.u32 %v275, 7
    %v277 = vsub.s32 0, %v276
    %v278 = vrot.slane %v273, %v277
    %v280 = vadd.f32 %v269, %v278
    %v281 = vadd.f32 %v270, %v278
    %v282 = vadd.f32 %v271, %v278
    %v283 = vadd.f32 %v272, %v278
    %284 = vst [vmem:[#allocation5] sm:$0xff] %v280
    %285 = vst [vmem:[#allocation5 + $0x8] sm:$0xff] %v281
    %286 = vst [vmem:[#allocation5 + $0x10] sm:$0xff] %v282
    %287 = vst [vmem:[#allocation5 + $0x18] sm:$0xff] %v283
    // Predicated region
    $region30: #{tpu_custom_call.1} parent=1 // pred_check
      _
    $region31: #{tpu_custom_call.1} parent=1 // pred_check_branch
      %289 = sbr.rel (0) target = $region33
    $region32: #{tpu_custom_call.1} parent=1 // pred_region
      %s291 = ssub.s32 512, 512
      %292 = vsyncadd [#allocation4], %s291
      %s293 = sshll.u32 [#allocation5], 4
      %s294 = int_to_ptr.vmem [resolvable:$true] %s293
      %299 = dma.vmem_to_hbm [thread:$0]  %s294, 512, %s6, [#allocation4], 128, 128, 8
    $region33: #{tpu_custom_call.1} parent=1 // pred_fallthru
      _
    // Predicated region
    $region34: #{tpu_custom_call.1} parent=1 // pred_check
      _
    $region35: #{tpu_custom_call.1} parent=1 // pred_check_branch
      %301 = sbr.rel (0) target = $region37
    $region36: #{tpu_custom_call.1} parent=1 // pred_region
      %302 = dma.done [#allocation4], 512
    $region37: #{tpu_custom_call.1} parent=1 // pred_fallthru
      _
    %303 = vsyncpa [#allocation3], 1
    %304 = vsyncpa [#allocation4], 1

</llo_original>
